<compile_context>
chip_gen: v7x
topology: tpu7x:2x2x1
jax: 0.10.0
libtpu: 0.0.40
codegen_flags: <defaults>
</compile_context>

<pallas_src>
import functools

import jax
import jax.numpy as jnp
from jax.experimental import pallas as pl
from jax.experimental.pallas import tpu as pltpu


def _round_up(x, m):
    return ((x + m - 1) // m) * m


def _make_kernel(K, dilation, TT, HP, compute_dtype, has_audio):
    """Kernel body for one (batch, time-tile) grid point.

    Ref order: ctx, [audio], w_masked, [w_audio], [w_hist], bias, out, [halo_scratch].
    """

    def kernel(*refs):
        refs = list(refs)
        ctx_ref = refs.pop(0)
        aud_ref = refs.pop(0) if has_audio else None
        wm_ref = refs.pop(0)
        wa_ref = refs.pop(0) if has_audio else None
        wh_ref = refs.pop(0) if K > 0 else None
        b_ref = refs.pop(0)
        o_ref = refs.pop(0)
        halo_ref = refs.pop(0) if K > 0 else None

        # Cast activations to the compute dtype in-kernel (VPU); no wrapper HBM pass.
        ctx = ctx_ref[0].astype(compute_dtype)                       # (TT, Cin)
        y = jnp.dot(ctx, wm_ref[...], preferred_element_type=jnp.float32)
        if has_audio:
            aud = aud_ref[0].astype(compute_dtype)                   # (TT, A)
            y = y + jnp.dot(aud, wa_ref[...], preferred_element_type=jnp.float32)

        if K > 0:
            # Causal halo carried across time tiles in a tiny VMEM scratch.
            @pl.when(pl.program_id(1) == 0)
            def _():
                halo_ref[...] = jnp.zeros_like(halo_ref)

            window = jnp.concatenate([halo_ref[...], ctx], axis=0)   # (HP+TT, Cin)
            for k in range(K):
                s = 1 + dilation * (K - 1 - k)                       # causal shift of tap k
                tap = window[HP - s: HP - s + TT]                    # context[t - s]
                y = y + jnp.dot(tap, wh_ref[k],
                                preferred_element_type=jnp.float32)

            # Save the tail of this tile as the halo for the next time tile.
            halo_ref[...] = ctx[TT - HP:, :]

        o_ref[0] = (y + b_ref[...]).astype(o_ref.dtype)

    return kernel


def masked_context_convolution(context, audio, params, *, heads, ch_in, ch_out,
                               audio_dim, kernel_size, dilation,
                               compute_dtype=jnp.bfloat16, out_dtype=None,
                               time_tile=2048):
    """context: (B, T, heads, ch_in); audio: (B, T, audio_dim) or None
    -> (B, T, heads, ch_out)"""
    # TODO(synk): forward_inference / reset (streaming per-step buffer) is not implemented.
    B, T, H, Ci = context.shape
    assert H == heads and Ci == ch_in
    Cin, Cout, A = heads * ch_in, heads * ch_out, audio_dim
    K, d = kernel_size, dilation
    f32 = jnp.float32
    out_dtype = context.dtype if out_dtype is None else out_dtype
    has_audio = audio is not None

    halo = (1 + d * (K - 1)) if K > 0 else 0        # max causal look-back of historic conv
    HP = _round_up(max(halo, 1), 8) if K > 0 else 0
    TT = _round_up(min(time_tile, T), 8)            # time-tile rows (sublane aligned)
    if K > 0:
        TT = max(TT, HP)
    num_t = pl.cdiv(T, TT)

    # ---- activations: views only, no HBM copies --------------------------------------
    ctx = context.reshape(B, T, Cin)                # free metadata reshape

    # ---- weights (tiny) ---------------------------------------------------------------
    row_head = jnp.arange(Cout) // ch_out
    col_head = jnp.arange(Cin) // ch_in
    mask = (col_head[None, :] < row_head[:, None]).astype(f32)       # head-causal (strict)
    wm = (params["masked_w"].astype(f32) * mask).T.astype(compute_dtype)      # (Cin, Cout)
    bias = params["masked_b"].astype(f32)
    if has_audio:
        wa = params["audio_w"].astype(f32).T.astype(compute_dtype)            # (A, Cout)
        bias = bias + params["audio_b"].astype(f32)
    if K > 0:
        # (Cout, Cin, K) -> (K, Cin, Cout); tap k multiplies context[t - (1 + d*(K-1-k))]
        wh = jnp.transpose(params["historic_w"].astype(f32),
                           (2, 1, 0)).astype(compute_dtype)
        bias = bias + params["historic_b"].astype(f32)
    bias = bias.reshape(1, Cout)

    kernel = _make_kernel(K, d, TT, HP, compute_dtype, has_audio)

    in_specs = [pl.BlockSpec((1, TT, Cin), lambda b, j: (b, j, 0))]   # context tile
    args = [ctx]
    if has_audio:
        in_specs.append(pl.BlockSpec((1, TT, A), lambda b, j: (b, j, 0)))
        args.append(audio)
    in_specs.append(pl.BlockSpec((Cin, Cout), lambda b, j: (0, 0)))   # masked weight
    args.append(wm)
    if has_audio:
        in_specs.append(pl.BlockSpec((A, Cout), lambda b, j: (0, 0)))
        args.append(wa)
    if K > 0:
        in_specs.append(pl.BlockSpec((K, Cin, Cout), lambda b, j: (0, 0, 0)))
        args.append(wh)
    in_specs.append(pl.BlockSpec((1, Cout), lambda b, j: (0, 0)))     # fused bias
    args.append(bias)

    scratch_shapes = [pltpu.VMEM((HP, Cin), compute_dtype)] if K > 0 else []
    # Halo carry makes the time axis stateful -> "arbitrary"; batch stays "parallel"
    # (megacore sharding on v7x).  Without the historic conv both axes are parallel.
    time_sem = "arbitrary" if K > 0 else "parallel"

    out = pl.pallas_call(
        kernel,
        out_shape=jax.ShapeDtypeStruct((B, T, Cout), out_dtype),
        grid=(B, num_t),
        in_specs=in_specs,
        out_specs=pl.BlockSpec((1, TT, Cout), lambda b, j: (b, j, 0)),
        scratch_shapes=scratch_shapes,
        compiler_params=pltpu.CompilerParams(
            dimension_semantics=("parallel", time_sem),
            vmem_limit_bytes=32 * 1024 * 1024),
    )(*args)

    return out.reshape(B, T, heads, ch_out)         # free reshape, no slice pass


def _reference(context, audio, params, *, heads, ch_in, ch_out, audio_dim,
               kernel_size, dilation):
    """Pure-JAX reference of the PyTorch forward (correctness gate)."""
    B, T = context.shape[0], context.shape[1]
    Cin, Cout, K, d = heads * ch_in, heads * ch_out, kernel_size, dilation
    hp = jax.lax.Precision.HIGHEST
    c = context.reshape(B, T, Cin).astype(jnp.float32)

    row_head = jnp.arange(Cout) // ch_out
    col_head = jnp.arange(Cin) // ch_in
    mask = (col_head[None, :] < row_head[:, None]).astype(jnp.float32)

    y = jnp.einsum("btc,oc->bto", c, params["masked_w"] * mask,
                   precision=hp) + params["masked_b"]
    if audio is not None:
        y = y + jnp.einsum("bta,oa->bto", audio.astype(jnp.float32),
                           params["audio_w"], precision=hp) + params["audio_b"]
    if K > 0:
        for k in range(K):
            shift = 1 + d * (K - 1 - k)
            pad = jnp.zeros((B, shift, Cin), jnp.float32)
            ck = jnp.concatenate([pad, c[:, :T - shift, :]], axis=1)
            y = y + jnp.einsum("btc,oc->bto", ck, params["historic_w"][:, :, k],
                               precision=hp)
        y = y + params["historic_b"]
    return y.reshape(B, T, heads, ch_out)


if __name__ == "__main__":
    heads, ch_in, ch_out, audio_dim = 4, 4, 4, 32
    Cin, Cout = heads * ch_in, heads * ch_out

    key = jax.random.PRNGKey(0)
    ks = jax.random.split(key, 10)
    params = {
        # nn.Conv1d(audio_dim, Cout, 1)       -> weight (Cout, audio_dim), bias (Cout,)
        "audio_w": 0.1 * jax.random.normal(ks[0], (Cout, audio_dim), jnp.float32),
        "audio_b": 0.1 * jax.random.normal(ks[1], (Cout,), jnp.float32),
        # nn.Conv1d(Cin, Cout, 1)             -> weight (Cout, Cin), bias (Cout,)
        "masked_w": 0.1 * jax.random.normal(ks[2], (Cout, Cin), jnp.float32),
        "masked_b": 0.1 * jax.random.normal(ks[3], (Cout,), jnp.float32),
        # nn.Conv1d(Cin, Cout, K=2, dilation) -> weight (Cout, Cin, 2), bias (Cout,)
        "historic_w": 0.1 * jax.random.normal(ks[4], (Cout, Cin, 2), jnp.float32),
        "historic_b": 0.1 * jax.random.normal(ks[5], (Cout,), jnp.float32),
    }

    def make_inputs(B, T, k1, k2):
        return (jax.random.normal(k1, (B, T, heads, ch_in), jnp.float32),
                jax.random.normal(k2, (B, T, audio_dim), jnp.float32))

    # --- case 1: single tile, K=2, d=1 ------------------------------------------------
    B, T, K, d = 2, 8, 2, 1
    context, audio = make_inputs(B, T, ks[6], ks[7])
    run = functools.partial(masked_context_convolution, heads=heads, ch_in=ch_in,
                            ch_out=ch_out, audio_dim=audio_dim,
                            kernel_size=K, dilation=d)
    ref = functools.partial(_reference, heads=heads, ch_in=ch_in, ch_out=ch_out,
                            audio_dim=audio_dim, kernel_size=K, dilation=d)
    y_ref = ref(context, audio, params)

    y32 = jax.block_until_ready(jax.jit(
        lambda c, a: run(c, a, params, compute_dtype=jnp.float32))(context, audio))
    assert y32.shape == (B, T, heads, ch_out)
    assert jnp.allclose(y32, y_ref, atol=2e-2, rtol=2e-2), "f32 kernel mismatch"

    ybf = jax.block_until_ready(jax.jit(
        lambda c, a: run(c, a, params, compute_dtype=jnp.bfloat16,
                         out_dtype=jnp.bfloat16))(context, audio))
    assert ybf.shape == (B, T, heads, ch_out) and ybf.dtype == jnp.bfloat16
    assert jnp.allclose(ybf.astype(jnp.float32), y_ref, atol=6e-2, rtol=6e-2), \
        "bf16 kernel mismatch"

    # --- case 2: multi-tile halo carry across time tiles, K=2, d=2, TT=16 -------------
    B2, T2, K2, d2 = 2, 48, 2, 2
    context2, audio2 = make_inputs(B2, T2, ks[8], ks[9])
    run2 = functools.partial(masked_context_convolution, heads=heads, ch_in=ch_in,
                             ch_out=ch_out, audio_dim=audio_dim,
                             kernel_size=K2, dilation=d2, time_tile=16)
    ref2 = functools.partial(_reference, heads=heads, ch_in=ch_in, ch_out=ch_out,
                             audio_dim=audio_dim, kernel_size=K2, dilation=d2)
    y2 = jax.block_until_ready(jax.jit(
        lambda c, a: run2(c, a, params, compute_dtype=jnp.float32))(context2, audio2))
    assert jnp.allclose(y2, ref2(context2, audio2, params), atol=2e-2, rtol=2e-2), \
        "multi-tile halo-carry mismatch"

    # --- case 3: kernel_size == 0 (no historic conv) -----------------------------------
    params0 = {k: v for k, v in params.items() if not k.startswith("historic")}
    run0 = functools.partial(masked_context_convolution, heads=heads, ch_in=ch_in,
                             ch_out=ch_out, audio_dim=audio_dim,
                             kernel_size=0, dilation=1)
    ref0 = functools.partial(_reference, heads=heads, ch_in=ch_in, ch_out=ch_out,
                             audio_dim=audio_dim, kernel_size=0, dilation=1)
    y0 = jax.block_until_ready(jax.jit(
        lambda c, a: run0(c, a, params0, compute_dtype=jnp.float32))(context, audio))
    assert jnp.allclose(y0, ref0(context, audio, params0), atol=2e-2, rtol=2e-2), \
        "K=0 kernel mismatch"

    # --- case 4: audio=None branch of forward() -----------------------------------------
    yna = jax.block_until_ready(jax.jit(
        lambda c: run(c, None, params, compute_dtype=jnp.float32))(context))
    assert jnp.allclose(yna, ref(context, None, params), atol=2e-2, rtol=2e-2), \
        "audio=None kernel mismatch"

    print("KERNEL_OK")
</pallas_src>

<mosaic_0001>
module attributes {stable_mosaic.version = 11 : i64} {
  func.func @kernel(%arg0: i32, %arg1: i32, %arg2: memref<1x8x16xf32, #tpu.memory_space<vmem>>, %arg3: memref<1x8x32xf32, #tpu.memory_space<vmem>>, %arg4: memref<16x16xf32, #tpu.memory_space<vmem>>, %arg5: memref<32x16xf32, #tpu.memory_space<vmem>>, %arg6: memref<2x16x16xf32, #tpu.memory_space<vmem>>, %arg7: memref<1x16xf32, #tpu.memory_space<vmem>>, %arg8: memref<1x8x16xf32, #tpu.memory_space<vmem>>, %arg9: memref<8x16xf32, #tpu.memory_space<vmem>>) attributes {dimension_semantics = [#tpu.dimension_semantics<parallel>, #tpu.dimension_semantics<arbitrary>], iteration_bounds = array<i64: 2, 1>, scalar_prefetch = 0 : i64, scratch_operands = 1 : i64, tpu.core_type = #tpu.core_type<tc>, window_params = [{transform_indices = @transform_0, window_bounds = array<i64: 1, 8, 16>}, {transform_indices = @transform_1, window_bounds = array<i64: 1, 8, 32>}, {pipeline_mode = #tpu.pipeline_mode<synchronous>, transform_indices = @transform_2, window_bounds = array<i64: 16, 16>}, {pipeline_mode = #tpu.pipeline_mode<synchronous>, transform_indices = @transform_3, window_bounds = array<i64: 32, 16>}, {pipeline_mode = #tpu.pipeline_mode<synchronous>, transform_indices = @transform_4, window_bounds = array<i64: 2, 16, 16>}, {pipeline_mode = #tpu.pipeline_mode<synchronous>, transform_indices = @transform_5, window_bounds = array<i64: 1, 16>}, {transform_indices = @transform_6, window_bounds = array<i64: 1, 8, 16>}]} {
    %c0 = arith.constant 0 : index
    %c0_0 = arith.constant 0 : index
    %c0_1 = arith.constant 0 : index
    %0 = vector.load %arg2[%c0, %c0_0, %c0_1] : memref<1x8x16xf32, #tpu.memory_space<vmem>>, vector<1x8x16xf32>
    %1 = vector.shape_cast %0 : vector<1x8x16xf32> to vector<8x16xf32>
    %c0_2 = arith.constant 0 : index
    %c0_3 = arith.constant 0 : index
    %2 = vector.load %arg4[%c0_2, %c0_3] : memref<16x16xf32, #tpu.memory_space<vmem>>, vector<16x16xf32>
    %cst = arith.constant dense<0.000000e+00> : vector<8x16xf32>
    %3 = tpu.matmul %1, %2, %cst {dimension_numbers = #tpu.dot_dimension_numbers<[1], [0], [0], [1], [0, 0, 1, 1], [], []>} : vector<8x16xf32>, vector<16x16xf32>, vector<8x16xf32> -> vector<8x16xf32>
    %c0_4 = arith.constant 0 : index
    %c0_5 = arith.constant 0 : index
    %c0_6 = arith.constant 0 : index
    %4 = vector.load %arg3[%c0_4, %c0_5, %c0_6] : memref<1x8x32xf32, #tpu.memory_space<vmem>>, vector<1x8x32xf32>
    %5 = vector.shape_cast %4 : vector<1x8x32xf32> to vector<8x32xf32>
    %c0_7 = arith.constant 0 : index
    %c0_8 = arith.constant 0 : index
    %6 = vector.load %arg5[%c0_7, %c0_8] : memref<32x16xf32, #tpu.memory_space<vmem>>, vector<32x16xf32>
    %cst_9 = arith.constant dense<0.000000e+00> : vector<8x16xf32>
    %7 = tpu.matmul %5, %6, %cst_9 {dimension_numbers = #tpu.dot_dimension_numbers<[1], [0], [0], [1], [0, 0, 1, 1], [], []>} : vector<8x32xf32>, vector<32x16xf32>, vector<8x16xf32> -> vector<8x16xf32>
    %8 = arith.addf %3, %7 : vector<8x16xf32>
    %c0_i32 = arith.constant 0 : i32
    %9 = arith.cmpi eq, %arg1, %c0_i32 : i32
    %10 = arith.extui %9 : i1 to i32
    %c0_i32_10 = arith.constant 0 : i32
    %11 = arith.cmpi ne, %10, %c0_i32_10 : i32
    scf.if %11 {
      %cst_27 = arith.constant 0.000000e+00 : f32
      %31 = vector.broadcast %cst_27 : f32 to vector<8x16xf32>
      %c0_28 = arith.constant 0 : index
      %c0_29 = arith.constant 0 : index
      %32 = vector.load %arg9[%c0_28, %c0_29] : memref<8x16xf32, #tpu.memory_space<vmem>>, vector<8x16xf32>
      tpu.vector_store %arg9[%c0_28, %c0_29], %31 {strides = array<i32>} : memref<8x16xf32, #tpu.memory_space<vmem>>, vector<8x16xf32>,
    } else {
    }
    %c0_11 = arith.constant 0 : index
    %c0_12 = arith.constant 0 : index
    %12 = vector.load %arg9[%c0_11, %c0_12] : memref<8x16xf32, #tpu.memory_space<vmem>>, vector<8x16xf32>
    %13 = tpu.concatenate %12, %1 in 0 : vector<8x16xf32>, vector<8x16xf32> -> vector<16x16xf32>
    %14 = vector.extract_strided_slice %13 {offsets = [6, 0], sizes = [8, 16], strides = [1, 1]} : vector<16x16xf32> to vector<8x16xf32>
    %c0_13 = arith.constant 0 : index
    %c0_14 = arith.constant 0 : index
    %c0_15 = arith.constant 0 : index
    %15 = vector.load %arg6[%c0_13, %c0_14, %c0_15] : memref<2x16x16xf32, #tpu.memory_space<vmem>>, vector<1x16x16xf32>
    %16 = vector.shape_cast %15 : vector<1x16x16xf32> to vector<16x16xf32>
    %cst_16 = arith.constant dense<0.000000e+00> : vector<8x16xf32>
    %17 = tpu.matmul %14, %16, %cst_16 {dimension_numbers = #tpu.dot_dimension_numbers<[1], [0], [0], [1], [0, 0, 1, 1], [], []>} : vector<8x16xf32>, vector<16x16xf32>, vector<8x16xf32> -> vector<8x16xf32>
    %18 = arith.addf %8, %17 : vector<8x16xf32>
    %19 = vector.extract_strided_slice %13 {offsets = [7, 0], sizes = [8, 16], strides = [1, 1]} : vector<16x16xf32> to vector<8x16xf32>
    %c1 = arith.constant 1 : index
    %c0_17 = arith.constant 0 : index
    %c0_18 = arith.constant 0 : index
    %20 = vector.load %arg6[%c1, %c0_17, %c0_18] : memref<2x16x16xf32, #tpu.memory_space<vmem>>, vector<1x16x16xf32>
    %21 = vector.shape_cast %20 : vector<1x16x16xf32> to vector<16x16xf32>
    %cst_19 = arith.constant dense<0.000000e+00> : vector<8x16xf32>
    %22 = tpu.matmul %19, %21, %cst_19 {dimension_numbers = #tpu.dot_dimension_numbers<[1], [0], [0], [1], [0, 0, 1, 1], [], []>} : vector<8x16xf32>, vector<16x16xf32>, vector<8x16xf32> -> vector<8x16xf32>
    %23 = arith.addf %18, %22 : vector<8x16xf32>
    %c0_20 = arith.constant 0 : index
    %c0_21 = arith.constant 0 : index
    %24 = vector.load %arg9[%c0_20, %c0_21] : memref<8x16xf32, #tpu.memory_space<vmem>>, vector<8x16xf32>
    tpu.vector_store %arg9[%c0_20, %c0_21], %1 {strides = array<i32>} : memref<8x16xf32, #tpu.memory_space<vmem>>, vector<8x16xf32>,
    %c0_22 = arith.constant 0 : index
    %c0_23 = arith.constant 0 : index
    %25 = vector.load %arg7[%c0_22, %c0_23] : memref<1x16xf32, #tpu.memory_space<vmem>>, vector<1x16xf32>
    %26 = vector.broadcast %25 : vector<1x16xf32> to vector<8x16xf32>
    %27 = arith.addf %23, %26 : vector<8x16xf32>
    %c0_24 = arith.constant 0 : index
    %c0_25 = arith.constant 0 : index
    %c0_26 = arith.constant 0 : index
    %28 = vector.load %arg8[%c0_24, %c0_25, %c0_26] : memref<1x8x16xf32, #tpu.memory_space<vmem>>, vector<1x8x16xf32>
    %29 = vector.shape_cast %28 : vector<1x8x16xf32> to vector<8x16xf32>
    %30 = vector.shape_cast %27 : vector<8x16xf32> to vector<1x8x16xf32>
    tpu.vector_store %arg8[%c0_24, %c0_25, %c0_26], %30 {strides = array<i32>} : memref<1x8x16xf32, #tpu.memory_space<vmem>>, vector<1x8x16xf32>,
    return
  }
  func.func @transform_0(%arg0: i32, %arg1: i32) -> (i32, i32, i32) {
    %c0_i32 = arith.constant 0 : i32
    %c0_i32_0 = arith.constant 0 : i32
    return %arg0, %arg1, %c0_i32 : i32, i32, i32
  }
  func.func @transform_1(%arg0: i32, %arg1: i32) -> (i32, i32, i32) {
    %c0_i32 = arith.constant 0 : i32
    %c0_i32_0 = arith.constant 0 : i32
    return %arg0, %arg1, %c0_i32 : i32, i32, i32
  }
  func.func @transform_2(%arg0: i32, %arg1: i32) -> (i32, i32) {
    %c0_i32 = arith.constant 0 : i32
    %c0_i32_0 = arith.constant 0 : i32
    %c0_i32_1 = arith.constant 0 : i32
    return %c0_i32, %c0_i32_0 : i32, i32
  }
  func.func @transform_3(%arg0: i32, %arg1: i32) -> (i32, i32) {
    %c0_i32 = arith.constant 0 : i32
    %c0_i32_0 = arith.constant 0 : i32
    %c0_i32_1 = arith.constant 0 : i32
    return %c0_i32, %c0_i32_0 : i32, i32
  }
  func.func @transform_4(%arg0: i32, %arg1: i32) -> (i32, i32, i32) {
    %c0_i32 = arith.constant 0 : i32
    %c0_i32_0 = arith.constant 0 : i32
    %c0_i32_1 = arith.constant 0 : i32
    %c0_i32_2 = arith.constant 0 : i32
    return %c0_i32, %c0_i32_0, %c0_i32_1 : i32, i32, i32
  }
  func.func @transform_5(%arg0: i32, %arg1: i32) -> (i32, i32) {
    %c0_i32 = arith.constant 0 : i32
    %c0_i32_0 = arith.constant 0 : i32
    %c0_i32_1 = arith.constant 0 : i32
    return %c0_i32, %c0_i32_0 : i32, i32
  }
  func.func @transform_6(%arg0: i32, %arg1: i32) -> (i32, i32, i32) {
    %c0_i32 = arith.constant 0 : i32
    %c0_i32_0 = arith.constant 0 : i32
    return %arg0, %arg1, %c0_i32 : i32, i32, i32
  }
}

</mosaic_0001>

<llo_original>
// kernel: _lambda_.1
$region0: #{_lambda_.1}
  #allocation0 [shape = 'u32[]', space=smem, size = 0x4, offset = 0x4, fixed_abs, tag = 'smem constant byte address 0x4 - core index']
  #allocation1 [shape = 'u32[144,128]{1,0:T(1,128)}', space=vmem, size = 0x12000, scoped, tag = 'internal scratch']
  #allocation2 [shape = 'f32[8,16]{1,0:T(8,128)}', space=vmem, size = 0x1000, scoped, tag = 'scratch operand']
  %s0 = inlined_call_operand.vmem [shape: f32[2,8,16], index: 0, kind: input, shape index: {}]
  %s1 = inlined_call_operand.vmem [shape: f32[2,8,32], index: 1, kind: input, shape index: {}]
  %s2 = inlined_call_operand.vmem [shape: f32[16,16], index: 2, kind: input, shape index: {}]
  %s3 = inlined_call_operand.vmem [shape: f32[32,16], index: 3, kind: input, shape index: {}]
  %s4 = inlined_call_operand.hbm [shape: f32[2,16,16], index: 4, kind: input, shape index: {}]
  %s5 = inlined_call_operand.vmem [shape: f32[1,16], index: 5, kind: input, shape index: {}]
  %s6 = inlined_call_operand.vmem [shape: f32[2,8,16], index: 6, kind: output, shape index: {}]
  %s7 = sld [smem:[#allocation0]]
  $region65: #{_lambda_.1} parent=0
    _
  %s9 = ssub.s32 1, %s7
  %s10 = scalar_select 0, %s9, %s7
  $region1: #{_lambda_.1} parent=0
    #allocation3 [shape = 'u8[16384]{0}', space=vmem, size = 0x4000, scoped, tag = 'input window, operand 4, single buffered']
    #allocation4 [shape = 's32[2]{0}', space=sflag, size = 0x8, scoped, tag = 'scoped memory for _lambda_.1']
    %11 = vsyncpa [#allocation4], 0
    loop: start=0, step=1, limit=4
    $region2: #{_lambda_.1} parent=1 // loop_pre_header
      _
    $region3: #{_lambda_.1} parent=1 // loop_header
      %s13 = sphi 0, %s17
      %p14 = scmp.ge.s32.totalorder %s13, 4
      %s20 = sphi 0, %s32
      %s21 = sphi 0, %s28
      %s22 = sphi 0, %s20
      %s23 = sphi 0, %s21
      %s24 = sphi 0, %s22
      %s25 = sphi 0, %s23
      %s37 = sphi 0, %s39
      %s40 = sphi 0, %s37
      %s41 = sphi 0, %s40
      %s57 = sphi 0, %s41
      %s65 = sphi 0, %s67
      %s68 = sphi 0, %s65
      %s69 = sphi 0, %s68
      %s85 = sphi 0, %s69
      %s89 = sphi 0, %s89
      %s91 = sphi 0, %s89
      %s92 = sphi 0, %s91
      %s106 = sphi 0, %s92
      %s110 = sphi 0, %s110
      %s112 = sphi 0, %s110
      %s113 = sphi 0, %s112
      %s127 = sphi 0, %s113
      %s131 = sphi 0, %s131
      %s133 = sphi 0, %s131
      %s134 = sphi 0, %s133
      %s148 = sphi 0, %s134
      %s152 = sphi 0, %s152
      %s154 = sphi 0, %s152
      %s155 = sphi 0, %s154
      %s169 = sphi 0, %s155
      %s177 = sphi 0, %s179
      %s180 = sphi 0, %s177
      %s181 = sphi 0, %s180
      %s197 = sphi 0, %s181
    $region4: #{_lambda_.1} parent=1 // loop_header_branch
      %16 = sbr.rel (%p14) target = $region8
    $region5: #{_lambda_.1} parent=1 // loop_body
      %s18 = ssub.s32 %s13, 1
      %s19 = ssub.s32 %s13, 2
      %s26 = sadd.s32 1, %s21
      %p27 = scmp.ge.s32.totalorder %s26, 1
      %s28 = scalar_select %p27, 0, %s26
      %s29 = sadd.s32 1, %s20
      %s30 = scalar_select %p27, %s29, %s20
      %p31 = scmp.ge.s32.totalorder %s30, 2
      %s32 = scalar_select %p31, 0, %s30
      %s33 = ssub.s32 %s20, %s32
      %s34 = ssub.s32 %s21, %s28
      %s35 = sor.u32 %s33, %s34
      %p36 = scmp.eq.s32.totalorder %s35, 0
      %s38 = sadd.s32 %s37, 1
      %s39 = scalar_select %p36, %s37, %s38
      %p42 = pneg %p36
      %p43 = scmp.eq.s32.totalorder %s13, 1
      %p44 = por %p42, %p43
      %p45 = scmp.ne.s32.totalorder %s37, %s40
      %p46 = scmp.eq.s32.totalorder %s13, 0
      %p47 = por %p45, %p46
      %p48 = scmp.ne.s32.totalorder %s37, %s40
      %p49 = scmp.eq.s32.totalorder %s18, 1
      %p50 = por %p48, %p49
      %p51 = scmp.ne.s32.totalorder %s40, %s41
      %p52 = scmp.eq.s32.totalorder %s18, 0
      %p53 = por %p51, %p52
      %p54 = scmp.ne.s32.totalorder %s40, %s41
      %p55 = scmp.eq.s32.totalorder %s19, 1
      %p56 = por %p54, %p55
      %p58 = scmp.ne.s32.totalorder %s41, %s57
      %p59 = scmp.eq.s32.totalorder %s19, 0
      %p60 = por %p58, %p59
      %s61 = ssub.s32 %s20, %s32
      %s62 = ssub.s32 %s21, %s28
      %s63 = sor.u32 %s61, %s62
      %p64 = scmp.eq.s32.totalorder %s63, 0
      %s66 = sadd.s32 %s65, 1
      %s67 = scalar_select %p64, %s65, %s66
      %p70 = pneg %p64
      %p71 = scmp.eq.s32.totalorder %s13, 1
      %p72 = por %p70, %p71
      %p73 = scmp.ne.s32.totalorder %s65, %s68
      %p74 = scmp.eq.s32.totalorder %s13, 0
      %p75 = por %p73, %p74
      %p76 = scmp.ne.s32.totalorder %s65, %s68
      %p77 = scmp.eq.s32.totalorder %s18, 1
      %p78 = por %p76, %p77
      %p79 = scmp.ne.s32.totalorder %s68, %s69
      %p80 = scmp.eq.s32.totalorder %s18, 0
      %p81 = por %p79, %p80
      %p82 = scmp.ne.s32.totalorder %s68, %s69
      %p83 = scmp.eq.s32.totalorder %s19, 1
      %p84 = por %p82, %p83
      %p86 = scmp.ne.s32.totalorder %s69, %s85
      %p87 = scmp.eq.s32.totalorder %s19, 0
      %p88 = por %p86, %p87
      %s90 = sadd.s32 %s89, 1
      %p93 = scmp.eq.s32.totalorder %s13, 1
      %p94 = scmp.ne.s32.totalorder %s89, %s91
      %p95 = scmp.eq.s32.totalorder %s13, 0
      %p96 = por %p94, %p95
      %p97 = scmp.ne.s32.totalorder %s89, %s91
      %p98 = scmp.eq.s32.totalorder %s18, 1
      %p99 = por %p97, %p98
      %p100 = scmp.ne.s32.totalorder %s91, %s92
      %p101 = scmp.eq.s32.totalorder %s18, 0
      %p102 = por %p100, %p101
      %p103 = scmp.ne.s32.totalorder %s91, %s92
      %p104 = scmp.eq.s32.totalorder %s19, 1
      %p105 = por %p103, %p104
      %p107 = scmp.ne.s32.totalorder %s92, %s106
      %p108 = scmp.eq.s32.totalorder %s19, 0
      %p109 = por %p107, %p108
      %s111 = sadd.s32 %s110, 1
      %p114 = scmp.eq.s32.totalorder %s13, 1
      %p115 = scmp.ne.s32.totalorder %s110, %s112
      %p116 = scmp.eq.s32.totalorder %s13, 0
      %p117 = por %p115, %p116
      %p118 = scmp.ne.s32.totalorder %s110, %s112
      %p119 = scmp.eq.s32.totalorder %s18, 1
      %p120 = por %p118, %p119
      %p121 = scmp.ne.s32.totalorder %s112, %s113
      %p122 = scmp.eq.s32.totalorder %s18, 0
      %p123 = por %p121, %p122
      %p124 = scmp.ne.s32.totalorder %s112, %s113
      %p125 = scmp.eq.s32.totalorder %s19, 1
      %p126 = por %p124, %p125
      %p128 = scmp.ne.s32.totalorder %s113, %s127
      %p129 = scmp.eq.s32.totalorder %s19, 0
      %p130 = por %p128, %p129
      %s132 = sadd.s32 %s131, 1
      %p135 = scmp.eq.s32.totalorder %s13, 1
      %p136 = scmp.ne.s32.totalorder %s131, %s133
      %p137 = scmp.eq.s32.totalorder %s13, 0
      %p138 = por %p136, %p137
      %p139 = scmp.ne.s32.totalorder %s131, %s133
      %p140 = scmp.eq.s32.totalorder %s18, 1
      %p141 = por %p139, %p140
      %p142 = scmp.ne.s32.totalorder %s133, %s134
      %p143 = scmp.eq.s32.totalorder %s18, 0
      %p144 = por %p142, %p143
      %p145 = scmp.ne.s32.totalorder %s133, %s134
      %p146 = scmp.eq.s32.totalorder %s19, 1
      %p147 = por %p145, %p146
      %p149 = scmp.ne.s32.totalorder %s134, %s148
      %p150 = scmp.eq.s32.totalorder %s19, 0
      %p151 = por %p149, %p150
      %s153 = sadd.s32 %s152, 1
      %p156 = scmp.eq.s32.totalorder %s13, 1
      %p157 = scmp.ne.s32.totalorder %s152, %s154
      %p158 = scmp.eq.s32.totalorder %s13, 0
      %p159 = por %p157, %p158
      %p160 = scmp.ne.s32.totalorder %s152, %s154
      %p161 = scmp.eq.s32.totalorder %s18, 1
      %p162 = por %p160, %p161
      %p163 = scmp.ne.s32.totalorder %s154, %s155
      %p164 = scmp.eq.s32.totalorder %s18, 0
      %p165 = por %p163, %p164
      %p166 = scmp.ne.s32.totalorder %s154, %s155
      %p167 = scmp.eq.s32.totalorder %s19, 1
      %p168 = por %p166, %p167
      %p170 = scmp.ne.s32.totalorder %s155, %s169
      %p171 = scmp.eq.s32.totalorder %s19, 0
      %p172 = por %p170, %p171
      %s173 = ssub.s32 %s20, %s32
      %s174 = ssub.s32 %s21, %s28
      %s175 = sor.u32 %s173, %s174
      %p176 = scmp.eq.s32.totalorder %s175, 0
      %s178 = sadd.s32 %s177, 1
      %s179 = scalar_select %p176, %s177, %s178
      %p182 = pneg %p176
      %p183 = scmp.eq.s32.totalorder %s13, 1
      %p184 = por %p182, %p183
      %p185 = scmp.ne.s32.totalorder %s177, %s180
      %p186 = scmp.eq.s32.totalorder %s13, 0
      %p187 = por %p185, %p186
      %p188 = scmp.ne.s32.totalorder %s177, %s180
      %p189 = scmp.eq.s32.totalorder %s18, 1
      %p190 = por %p188, %p189
      %p191 = scmp.ne.s32.totalorder %s180, %s181
      %p192 = scmp.eq.s32.totalorder %s18, 0
      %p193 = por %p191, %p192
      %p194 = scmp.ne.s32.totalorder %s180, %s181
      %p195 = scmp.eq.s32.totalorder %s19, 1
      %p196 = por %p194, %p195
      %p198 = scmp.ne.s32.totalorder %s181, %s197
      %p199 = scmp.eq.s32.totalorder %s19, 0
      %p200 = por %p198, %p199
      %p201 = scmp.le.s32.totalorder 1, %s13
      %p202 = scmp.lt.s32.totalorder %s13, 3
      %p203 = pnand %p201, %p202
      %p204 = pneg %p203
      // Predicated region
      $region9: #{_lambda_.1} parent=5 // pred_check
        _
      $region10: #{_lambda_.1} parent=5 // pred_check_branch
        %206 = sbr.rel (%p203) target = $region12
      $region11: #{_lambda_.1} parent=5 // pred_region
        %s207 = ssub.s32 %s13, 1
        // Predicated region
        $region13: #{_lambda_.1} parent=11 // pred_check
          %p208 = pneg %p102
        $region14: #{_lambda_.1} parent=11 // pred_check_branch
          %210 = sbr.rel (%p208) target = $region16
        $region15: #{_lambda_.1} parent=11 // pred_region
          _
        $region16: #{_lambda_.1} parent=11 // pred_fallthru
          _
        // Predicated region
        $region17: #{_lambda_.1} parent=11 // pred_check
          %p211 = pneg %p123
        $region18: #{_lambda_.1} parent=11 // pred_check_branch
          %213 = sbr.rel (%p211) target = $region20
        $region19: #{_lambda_.1} parent=11 // pred_region
          _
        $region20: #{_lambda_.1} parent=11 // pred_fallthru
          _
        // Predicated region
        $region21: #{_lambda_.1} parent=11 // pred_check
          %p214 = pneg %p144
        $region22: #{_lambda_.1} parent=11 // pred_check_branch
          %216 = sbr.rel (%p214) target = $region24
        $region23: #{_lambda_.1} parent=11 // pred_region
          %s218 = ssub.s32 512, 512
          %219 = vsyncadd [#allocation4], %s218
          %s220 = sshll.u32 [#allocation3], 4
          %s221 = int_to_ptr.vmem [resolvable:$true] %s220
          %226 = dma.hbm_to_vmem [thread:$0]  %s4, 512, %s221, [#allocation4], 128, 128, 8
        $region24: #{_lambda_.1} parent=11 // pred_fallthru
          _
        // Predicated region
        $region25: #{_lambda_.1} parent=11 // pred_check
          %p227 = pneg %p165
        $region26: #{_lambda_.1} parent=11 // pred_check_branch
          %229 = sbr.rel (%p227) target = $region28
        $region27: #{_lambda_.1} parent=11 // pred_region
          _
        $region28: #{_lambda_.1} parent=11 // pred_fallthru
          _
      $region12: #{_lambda_.1} parent=5 // pred_fallthru
        _
      %p230 = scmp.lt.s32.totalorder %s13, 2
      // Predicated region
      $region29: #{_lambda_.1} parent=5 // pred_check
        %p231 = pneg %p230
      $region30: #{_lambda_.1} parent=5 // pred_check_branch
        %233 = sbr.rel (%p231) target = $region32
      $region31: #{_lambda_.1} parent=5 // pred_region
        // Predicated region
        $region33: #{_lambda_.1} parent=31 // pred_check
          %p234 = pneg %p47
        $region34: #{_lambda_.1} parent=31 // pred_check_branch
          %236 = sbr.rel (%p234) target = $region36
        $region35: #{_lambda_.1} parent=31 // pred_region
          %p237 = scmp.lt.s32.totalorder %s20, 1
          %s238 = scalar_select %p237, %s20, 1
          %p239 = scmp.lt.s32.totalorder %s21, 0
          %s240 = scalar_select %p239, %s21, 0
          %s241 = sadd.s32 %s240, %s238
          %s242 = smul.addr %s241, 8
          %s243 = scalar_lea.vmem %s0, %s242
        $region36: #{_lambda_.1} parent=31 // pred_fallthru
          _
        // Predicated region
        $region37: #{_lambda_.1} parent=31 // pred_check
          %p244 = pneg %p75
        $region38: #{_lambda_.1} parent=31 // pred_check_branch
          %246 = sbr.rel (%p244) target = $region40
        $region39: #{_lambda_.1} parent=31 // pred_region
          %p247 = scmp.lt.s32.totalorder %s20, 1
          %s248 = scalar_select %p247, %s20, 1
          %p249 = scmp.lt.s32.totalorder %s21, 0
          %s250 = scalar_select %p249, %s21, 0
          %s251 = sadd.s32 %s250, %s248
          %s252 = smul.addr %s251, 8
          %s253 = scalar_lea.vmem %s1, %s252
        $region40: #{_lambda_.1} parent=31 // pred_fallthru
          _
      $region32: #{_lambda_.1} parent=5 // pred_fallthru
        _
      %p254 = scmp.le.s32.totalorder 1, %s13
      %p255 = scmp.lt.s32.totalorder %s13, 3
      %p256 = pnand %p254, %p255
      %p257 = pneg %p256
      // Predicated region
      $region41: #{_lambda_.1} parent=5 // pred_check
        _
      $region42: #{_lambda_.1} parent=5 // pred_check_branch
        %259 = sbr.rel (%p256) target = $region44
      $region43: #{_lambda_.1} parent=5 // pred_region
        %s260 = ssub.s32 %s13, 1
        // Predicated region
        $region45: #{_lambda_.1} parent=43 // pred_check
          %p261 = pneg %p144
        $region46: #{_lambda_.1} parent=43 // pred_check_branch
          %263 = sbr.rel (%p261) target = $region48
        $region47: #{_lambda_.1} parent=43 // pred_region
          %264 = dma.done [#allocation4], 512
        $region48: #{_lambda_.1} parent=43 // pred_fallthru
          _
        %p265 = scmp.lt.s32.totalorder %s22, 1
        %s266 = scalar_select %p265, %s22, 1
        %p267 = scmp.lt.s32.totalorder %s23, 0
        %s268 = scalar_select %p267, %s23, 0
        %s269 = sadd.s32 %s268, %s266
        %s270 = smul.addr %s269, 8
        %s271 = scalar_lea.vmem %s0, %s270
        %p272 = pneg %p53
        %p273 = pneg %p50
        %p274 = scmp.lt.s32.totalorder %s22, 1
        %s275 = scalar_select %p274, %s22, 1
        %p276 = scmp.lt.s32.totalorder %s23, 0
        %s277 = scalar_select %p276, %s23, 0
        %s278 = sadd.s32 %s277, %s275
        %s279 = smul.addr %s278, 8
        %s280 = scalar_lea.vmem %s1, %s279
        %p281 = pneg %p81
        %p282 = pneg %p78
        %p283 = pneg %p102
        %p284 = pneg %p99
        %p285 = pneg %p123
        %p286 = pneg %p120
        %p287 = pneg %p144
        %p288 = pneg %p141
        %p289 = pneg %p165
        %p290 = pneg %p162
        %p291 = pneg %p193
        %p292 = pneg %p190
        %p293 = scmp.lt.s32.totalorder %s22, 1
        %s294 = scalar_select %p293, %s22, 1
        %p295 = scmp.lt.s32.totalorder %s23, 0
        %s296 = scalar_select %p295, %s23, 0
        %s297 = sadd.s32 %s296, %s294
        %s298 = smul.addr %s297, 8
        %s299 = scalar_lea.vmem %s6, %s298
        %p300 = scmp.lt.s32.totalorder %s22, 1
        %s301 = scalar_select %p300, %s22, 1
        %p302 = scmp.lt.s32.totalorder %s23, 0
        %s303 = scalar_select %p302, %s23, 0
        %s304 = sadd.s32 %s303, %s301
        %s305 = smul.addr %s304, 8
        %s306 = scalar_lea.vmem %s0, %s305
        %p307 = scmp.lt.s32.totalorder %s22, 1
        %s308 = scalar_select %p307, %s22, 1
        %p309 = scmp.lt.s32.totalorder %s23, 0
        %s310 = scalar_select %p309, %s23, 0
        %s311 = sadd.s32 %s310, %s308
        %s312 = smul.addr %s311, 8
        %s313 = scalar_lea.vmem %s1, %s312
        %p314 = scmp.lt.s32.totalorder %s22, 1
        %s315 = scalar_select %p314, %s22, 1
        %p316 = scmp.lt.s32.totalorder %s23, 0
        %s317 = scalar_select %p316, %s23, 0
        %s318 = sadd.s32 %s317, %s315
        %s319 = smul.addr %s318, 8
        %s320 = scalar_lea.vmem %s6, %s319
        %v321 = vld [vmem:[%s306] sm:$0xff]
        %v322 = vld [vmem:[%s2] sm:$0xff]
        %v323 = vld [vmem:[%s2 + $0x8] sm:$0xff]
        %v324 = vld [vmem:[%s313] sm:$0xff]
        %v325 = vld [vmem:[%s3] sm:$0xff]
        %v326 = vld [vmem:[%s3 + $0x8] sm:$0xff]
        %v327 = vld [vmem:[%s3 + $0x10] sm:$0xff]
        %v328 = vld [vmem:[%s3 + $0x18] sm:$0xff]
        %vm329 = vcmask 261120
        %v331 = vsel %vm329, %v324, 0
        %333 = vmatprep.subr.mxu0 0.0
        %334 = vmatpush1.msra.mxu0 %v325
        %335 = vmatprep.subr.mxu0 0.0
        %336 = vmatpush1.msra.mxu0 %v326
        %337 = vmatprep.subr.mxu0 0.0
        %338 = vmatpush1.msra.mxu0 %v327
        %339 = vmatprep.subr.mxu0 0.0
        %340 = vmatpush1.msra.mxu0 %v328
        %341 = vmatprep.subr.mxu0 0.0
        %342 = vmatpush1.msra.mxu0 0.0
        %343 = vmatprep.subr.mxu0 0.0
        %344 = vmatpush1.msra.mxu0 0.0
        %345 = vmatprep.subr.mxu0 0.0
        %346 = vmatpush1.msra.mxu0 0.0
        %347 = vmatprep.subr.mxu0 0.0
        %348 = vmatpush1.msra.mxu0 0.0
        %349 = vmatprep.subr.mxu0 0.0
        %350 = vmatpush1.msra.mxu0 0.0
        %351 = vmatprep.subr.mxu0 0.0
        %352 = vmatpush1.msra.mxu0 0.0
        %353 = vmatprep.subr.mxu0 0.0
        %354 = vmatpush1.msra.mxu0 0.0
        %355 = vmatprep.subr.mxu0 0.0
        %356 = vmatpush1.msra.mxu0 0.0
        %357 = vmatprep.subr.mxu0 0.0
        %358 = vmatpush1.msra.mxu0 0.0
        %359 = vmatprep.subr.mxu0 0.0
        %360 = vmatpush1.msra.mxu0 0.0
        %361 = vmatprep.subr.mxu0 0.0
        %362 = vmatpush1.msra.mxu0 0.0
        %363 = vmatprep.subr.mxu0 0.0
        %364 = vmatpush1.msra.mxu0 0.0
        %365 = vmatprep.subr.mxu0 0.0
        %366 = vmatpush1.msra.mxu0 0.0
        %367 = vmatprep.subr.mxu0 0.0
        %368 = vmatpush1.msra.mxu0 0.0
        %369 = vmatprep.subr.mxu0 0.0
        %370 = vmatpush1.msra.mxu0 0.0
        %371 = vmatprep.subr.mxu0 0.0
        %372 = vmatpush1.msra.mxu0 0.0
        %373 = vmatprep.subr.mxu0 0.0
        %374 = vmatpush1.msra.mxu0 0.0
        %375 = vmatprep.subr.mxu0 0.0
        %376 = vmatpush1.msra.mxu0 0.0
        %377 = vmatprep.subr.mxu0 0.0
        %378 = vmatpush1.msra.mxu0 0.0
        %379 = vmatprep.subr.mxu0 0.0
        %380 = vmatpush1.msra.mxu0 0.0
        %381 = vmatprep.subr.mxu0 0.0
        %382 = vmatpush1.msra.mxu0 0.0
        %383 = vmatprep.subr.mxu0 0.0
        %384 = vmatpush1.msra.mxu0 0.0
        %385 = vmatprep.subr.mxu0 0.0
        %386 = vmatpush1.msra.mxu0 0.0
        %387 = vmatprep.subr.mxu0 0.0
        %388 = vmatpush1.msra.mxu0 0.0
        %389 = vmatprep.subr.mxu0 0.0
        %390 = vmatpush1.msra.mxu0 0.0
        %391 = vmatprep.subr.mxu0 0.0
        %392 = vmatpush1.msra.mxu0 0.0
        %393 = vmatprep.subr.mxu0 0.0
        %394 = vmatpush1.msra.mxu0 0.0
        %395 = vmatprep.subr.mxu0 0.0
        %396 = vmatpush1.msra.mxu0 0.0
        %397 = vmatprep.mubr.f32.mxu0 0.0
        %398 = vmatmul.mubr.f32.gmra.mrb[0].mxu0 %v331
        %v399 = vpop.f32.mrb[0].mxu0
        %v400 = vadd.f32 0.0, %v399
        %v401 = vpop.f32.mrb[0].mxu0
        %402 = vdwg.mxu0
        %vm403 = vcmask 130048
        %v405 = vsel %vm403, %v321, 0
        %407 = vmatprep.subr.mxu0 0.0
        %408 = vmatpush1.msra.mxu0 %v322
        %409 = vmatprep.subr.mxu0 0.0
        %410 = vmatpush1.msra.mxu0 %v323
        %411 = vmatprep.subr.mxu0 0.0
        %412 = vmatpush1.msra.mxu0 0.0
        %413 = vmatprep.subr.mxu0 0.0
        %414 = vmatpush1.msra.mxu0 0.0
        %415 = vmatprep.subr.mxu0 0.0
        %416 = vmatpush1.msra.mxu0 0.0
        %417 = vmatprep.subr.mxu0 0.0
        %418 = vmatpush1.msra.mxu0 0.0
        %419 = vmatprep.subr.mxu0 0.0
        %420 = vmatpush1.msra.mxu0 0.0
        %421 = vmatprep.subr.mxu0 0.0
        %422 = vmatpush1.msra.mxu0 0.0
        %423 = vmatprep.subr.mxu0 0.0
        %424 = vmatpush1.msra.mxu0 0.0
        %425 = vmatprep.subr.mxu0 0.0
        %426 = vmatpush1.msra.mxu0 0.0
        %427 = vmatprep.subr.mxu0 0.0
        %428 = vmatpush1.msra.mxu0 0.0
        %429 = vmatprep.subr.mxu0 0.0
        %430 = vmatpush1.msra.mxu0 0.0
        %431 = vmatprep.subr.mxu0 0.0
        %432 = vmatpush1.msra.mxu0 0.0
        %433 = vmatprep.subr.mxu0 0.0
        %434 = vmatpush1.msra.mxu0 0.0
        %435 = vmatprep.subr.mxu0 0.0
        %436 = vmatpush1.msra.mxu0 0.0
        %437 = vmatprep.subr.mxu0 0.0
        %438 = vmatpush1.msra.mxu0 0.0
        %439 = vmatprep.subr.mxu0 0.0
        %440 = vmatpush1.msra.mxu0 0.0
        %441 = vmatprep.subr.mxu0 0.0
        %442 = vmatpush1.msra.mxu0 0.0
        %443 = vmatprep.subr.mxu0 0.0
        %444 = vmatpush1.msra.mxu0 0.0
        %445 = vmatprep.subr.mxu0 0.0
        %446 = vmatpush1.msra.mxu0 0.0
        %447 = vmatprep.subr.mxu0 0.0
        %448 = vmatpush1.msra.mxu0 0.0
        %449 = vmatprep.subr.mxu0 0.0
        %450 = vmatpush1.msra.mxu0 0.0
        %451 = vmatprep.subr.mxu0 0.0
        %452 = vmatpush1.msra.mxu0 0.0
        %453 = vmatprep.subr.mxu0 0.0
        %454 = vmatpush1.msra.mxu0 0.0
        %455 = vmatprep.subr.mxu0 0.0
        %456 = vmatpush1.msra.mxu0 0.0
        %457 = vmatprep.subr.mxu0 0.0
        %458 = vmatpush1.msra.mxu0 0.0
        %459 = vmatprep.subr.mxu0 0.0
        %460 = vmatpush1.msra.mxu0 0.0
        %461 = vmatprep.subr.mxu0 0.0
        %462 = vmatpush1.msra.mxu0 0.0
        %463 = vmatprep.subr.mxu0 0.0
        %464 = vmatpush1.msra.mxu0 0.0
        %465 = vmatprep.subr.mxu0 0.0
        %466 = vmatpush1.msra.mxu0 0.0
        %467 = vmatprep.subr.mxu0 0.0
        %468 = vmatpush1.msra.mxu0 0.0
        %469 = vmatprep.subr.mxu0 0.0
        %470 = vmatpush1.msra.mxu0 0.0
        %471 = vmatprep.mubr.f32.mxu0 0.0
        %472 = vmatmul.mubr.f32.gmra.mrb[0].mxu0 %v405
        %v473 = vpop.f32.mrb[0].mxu0
        %v474 = vadd.f32 %v400, %v473
        %v475 = vpop.f32.mrb[0].mxu0
        %476 = vdwg.mxu0
        %p477 = scmp.eq.s32.totalorder %s23, 0
        // Predicated region
        $region49: #{_lambda_.1} parent=43 // pred_check
          %p478 = pneg %p477
        $region50: #{_lambda_.1} parent=43 // pred_check_branch
          %480 = sbr.rel (%p478) target = $region52
        $region51: #{_lambda_.1} parent=43 // pred_region
          %481 = vst.msk [vmem:[#allocation2] sm:$0xff] %vm403, 0.0
        $region52: #{_lambda_.1} parent=43 // pred_fallthru
          _
        %v482 = vld [vmem:[#allocation2] sm:$0xff]
        %v483 = vld [vmem:[#allocation3] sm:$0xff]
        %v484 = vld [vmem:[#allocation3 + $0x8] sm:$0xff]
        %vm486 = vcmask 1041408
        %v487 = vrot.slane %v482, 6
        %v488 = vrot.slane %v321, 6
        %v489 = vsel %vm486, %v487, %v488
        %v490 = vsel %vm403, %v489, 0
        %492 = vmatprep.subr.mxu0 0.0
        %493 = vmatpush1.msra.mxu0 %v483
        %494 = vmatprep.subr.mxu0 0.0
        %495 = vmatpush1.msra.mxu0 %v484
        %496 = vmatprep.subr.mxu0 0.0
        %497 = vmatpush1.msra.mxu0 0.0
        %498 = vmatprep.subr.mxu0 0.0
        %499 = vmatpush1.msra.mxu0 0.0
        %500 = vmatprep.subr.mxu0 0.0
        %501 = vmatpush1.msra.mxu0 0.0
        %502 = vmatprep.subr.mxu0 0.0
        %503 = vmatpush1.msra.mxu0 0.0
        %504 = vmatprep.subr.mxu0 0.0
        %505 = vmatpush1.msra.mxu0 0.0
        %506 = vmatprep.subr.mxu0 0.0
        %507 = vmatpush1.msra.mxu0 0.0
        %508 = vmatprep.subr.mxu0 0.0
        %509 = vmatpush1.msra.mxu0 0.0
        %510 = vmatprep.subr.mxu0 0.0
        %511 = vmatpush1.msra.mxu0 0.0
        %512 = vmatprep.subr.mxu0 0.0
        %513 = vmatpush1.msra.mxu0 0.0
        %514 = vmatprep.subr.mxu0 0.0
        %515 = vmatpush1.msra.mxu0 0.0
        %516 = vmatprep.subr.mxu0 0.0
        %517 = vmatpush1.msra.mxu0 0.0
        %518 = vmatprep.subr.mxu0 0.0
        %519 = vmatpush1.msra.mxu0 0.0
        %520 = vmatprep.subr.mxu0 0.0
        %521 = vmatpush1.msra.mxu0 0.0
        %522 = vmatprep.subr.mxu0 0.0
        %523 = vmatpush1.msra.mxu0 0.0
        %524 = vmatprep.subr.mxu0 0.0
        %525 = vmatpush1.msra.mxu0 0.0
        %526 = vmatprep.subr.mxu0 0.0
        %527 = vmatpush1.msra.mxu0 0.0
        %528 = vmatprep.subr.mxu0 0.0
        %529 = vmatpush1.msra.mxu0 0.0
        %530 = vmatprep.subr.mxu0 0.0
        %531 = vmatpush1.msra.mxu0 0.0
        %532 = vmatprep.subr.mxu0 0.0
        %533 = vmatpush1.msra.mxu0 0.0
        %534 = vmatprep.subr.mxu0 0.0
        %535 = vmatpush1.msra.mxu0 0.0
        %536 = vmatprep.subr.mxu0 0.0
        %537 = vmatpush1.msra.mxu0 0.0
        %538 = vmatprep.subr.mxu0 0.0
        %539 = vmatpush1.msra.mxu0 0.0
        %540 = vmatprep.subr.mxu0 0.0
        %541 = vmatpush1.msra.mxu0 0.0
        %542 = vmatprep.subr.mxu0 0.0
        %543 = vmatpush1.msra.mxu0 0.0
        %544 = vmatprep.subr.mxu0 0.0
        %545 = vmatpush1.msra.mxu0 0.0
        %546 = vmatprep.subr.mxu0 0.0
        %547 = vmatpush1.msra.mxu0 0.0
        %548 = vmatprep.subr.mxu0 0.0
        %549 = vmatpush1.msra.mxu0 0.0
        %550 = vmatprep.subr.mxu0 0.0
        %551 = vmatpush1.msra.mxu0 0.0
        %552 = vmatprep.subr.mxu0 0.0
        %553 = vmatpush1.msra.mxu0 0.0
        %554 = vmatprep.subr.mxu0 0.0
        %555 = vmatpush1.msra.mxu0 0.0
        %556 = vmatprep.mubr.f32.mxu0 0.0
        %557 = vmatmul.mubr.f32.gmra.mrb[0].mxu0 %v490
        %v558 = vpop.f32.mrb[0].mxu0
        %v559 = vadd.f32 0.0, %v558
        %v560 = vpop.f32.mrb[0].mxu0
        %561 = vdwg.mxu0
        %v562 = vadd.f32 %v474, %v559
        %s563 = scalar_lea.vmem [#allocation3], 16
        %v564 = vld [vmem:[%s563] sm:$0xff]
        %v565 = vld [vmem:[%s563 + $0x8] sm:$0xff]
        %vm566 = vcmask 1040384
        %v567 = vrot.slane %v482, 7
        %v568 = vrot.slane %v321, 7
        %v569 = vsel %vm566, %v567, %v568
        %v570 = vsel %vm403, %v569, 0
        %572 = vmatprep.subr.mxu0 0.0
        %573 = vmatpush1.msra.mxu0 %v564
        %574 = vmatprep.subr.mxu0 0.0
        %575 = vmatpush1.msra.mxu0 %v565
        %576 = vmatprep.subr.mxu0 0.0
        %577 = vmatpush1.msra.mxu0 0.0
        %578 = vmatprep.subr.mxu0 0.0
        %579 = vmatpush1.msra.mxu0 0.0
        %580 = vmatprep.subr.mxu0 0.0
        %581 = vmatpush1.msra.mxu0 0.0
        %582 = vmatprep.subr.mxu0 0.0
        %583 = vmatpush1.msra.mxu0 0.0
        %584 = vmatprep.subr.mxu0 0.0
        %585 = vmatpush1.msra.mxu0 0.0
        %586 = vmatprep.subr.mxu0 0.0
        %587 = vmatpush1.msra.mxu0 0.0
        %588 = vmatprep.subr.mxu0 0.0
        %589 = vmatpush1.msra.mxu0 0.0
        %590 = vmatprep.subr.mxu0 0.0
        %591 = vmatpush1.msra.mxu0 0.0
        %592 = vmatprep.subr.mxu0 0.0
        %593 = vmatpush1.msra.mxu0 0.0
        %594 = vmatprep.subr.mxu0 0.0
        %595 = vmatpush1.msra.mxu0 0.0
        %596 = vmatprep.subr.mxu0 0.0
        %597 = vmatpush1.msra.mxu0 0.0
        %598 = vmatprep.subr.mxu0 0.0
        %599 = vmatpush1.msra.mxu0 0.0
        %600 = vmatprep.subr.mxu0 0.0
        %601 = vmatpush1.msra.mxu0 0.0
        %602 = vmatprep.subr.mxu0 0.0
        %603 = vmatpush1.msra.mxu0 0.0
        %604 = vmatprep.subr.mxu0 0.0
        %605 = vmatpush1.msra.mxu0 0.0
        %606 = vmatprep.subr.mxu0 0.0
        %607 = vmatpush1.msra.mxu0 0.0
        %608 = vmatprep.subr.mxu0 0.0
        %609 = vmatpush1.msra.mxu0 0.0
        %610 = vmatprep.subr.mxu0 0.0
        %611 = vmatpush1.msra.mxu0 0.0
        %612 = vmatprep.subr.mxu0 0.0
        %613 = vmatpush1.msra.mxu0 0.0
        %614 = vmatprep.subr.mxu0 0.0
        %615 = vmatpush1.msra.mxu0 0.0
        %616 = vmatprep.subr.mxu0 0.0
        %617 = vmatpush1.msra.mxu0 0.0
        %618 = vmatprep.subr.mxu0 0.0
        %619 = vmatpush1.msra.mxu0 0.0
        %620 = vmatprep.subr.mxu0 0.0
        %621 = vmatpush1.msra.mxu0 0.0
        %622 = vmatprep.subr.mxu0 0.0
        %623 = vmatpush1.msra.mxu0 0.0
        %624 = vmatprep.subr.mxu0 0.0
        %625 = vmatpush1.msra.mxu0 0.0
        %626 = vmatprep.subr.mxu0 0.0
        %627 = vmatpush1.msra.mxu0 0.0
        %628 = vmatprep.subr.mxu0 0.0
        %629 = vmatpush1.msra.mxu0 0.0
        %630 = vmatprep.subr.mxu0 0.0
        %631 = vmatpush1.msra.mxu0 0.0
        %632 = vmatprep.subr.mxu0 0.0
        %633 = vmatpush1.msra.mxu0 0.0
        %634 = vmatprep.subr.mxu0 0.0
        %635 = vmatpush1.msra.mxu0 0.0
        %636 = vmatprep.mubr.f32.mxu0 0.0
        %637 = vmatmul.mubr.f32.gmra.mrb[0].mxu0 %v570
        %v638 = vpop.f32.mrb[0].mxu0
        %v639 = vadd.f32 0.0, %v638
        %v640 = vpop.f32.mrb[0].mxu0
        %641 = vdwg.mxu0
        %v642 = vadd.f32 %v562, %v639
        %643 = vst.msk [vmem:[#allocation2] sm:$0xff] %vm403, %v321
        %v644 = vld [vmem:[%s5] sm:$0x1]
        %v646 = vlaneseq
        %v647 = vshrl.u32 %v646, 7
        %v648 = vsub.s32 0, %v647
        %v649 = vrot.slane %v644, %v648
        %v651 = vadd.f32 %v642, %v649
        %652 = vst.msk [vmem:[%s320] sm:$0xff] %vm403, %v651
        %p653 = scmp.lt.s32.totalorder %s22, 1
        %s654 = scalar_select %p653, %s22, 1
        %p655 = scmp.lt.s32.totalorder %s23, 0
        %s656 = scalar_select %p655, %s23, 0
        %s657 = sadd.s32 %s656, %s654
        %s658 = smul.addr %s657, 8
        %s659 = scalar_lea.vmem %s6, %s658
        // Predicated region
        $region53: #{_lambda_.1} parent=43 // pred_check
          %p660 = pneg %p190
        $region54: #{_lambda_.1} parent=43 // pred_check_branch
          %662 = sbr.rel (%p660) target = $region56
        $region55: #{_lambda_.1} parent=43 // pred_region
          _
        $region56: #{_lambda_.1} parent=43 // pred_fallthru
          _
      $region44: #{_lambda_.1} parent=5 // pred_fallthru
        _
      %p663 = scmp.le.s32.totalorder 2, %s13
      // Predicated region
      $region57: #{_lambda_.1} parent=5 // pred_check
        %p664 = pneg %p663
      $region58: #{_lambda_.1} parent=5 // pred_check_branch
        %666 = sbr.rel (%p664) target = $region60
      $region59: #{_lambda_.1} parent=5 // pred_region
        %s667 = ssub.s32 %s13, 2
        // Predicated region
        $region61: #{_lambda_.1} parent=59 // pred_check
          %p668 = pneg %p196
        $region62: #{_lambda_.1} parent=59 // pred_check_branch
          %670 = sbr.rel (%p668) target = $region64
        $region63: #{_lambda_.1} parent=59 // pred_region
          %p671 = scmp.lt.s32.totalorder %s24, 1
          %s672 = scalar_select %p671, %s24, 1
          %p673 = scmp.lt.s32.totalorder %s25, 0
          %s674 = scalar_select %p673, %s25, 0
          %s675 = sadd.s32 %s674, %s672
          %s676 = smul.addr %s675, 8
          %s677 = scalar_lea.vmem %s6, %s676
        $region64: #{_lambda_.1} parent=59 // pred_fallthru
          _
      $region60: #{_lambda_.1} parent=5 // pred_fallthru
        _
    $region6: #{_lambda_.1} parent=1 // loop_footer
      %s17 = sadd.s32 1, %s13
    $region7: #{_lambda_.1} parent=1 // loop_footer_branch
      %12 = sbr.rel target = $region3
    $region8: #{_lambda_.1} parent=1 // loop_exit
      _
    %678 = vsyncpa [#allocation4], 1
    %s679 = scalar_lea.sflag [#allocation4], 1
    %680 = vsyncpa %s679, 1

</llo_original>
